<compile_context>
chip_gen: v7x
topology: tpu7x:2x2x1
jax: 0.10.0
libtpu: 0.0.40
codegen_flags: <defaults>
</compile_context>

<pallas_src>
import functools

import jax
import jax.numpy as jnp
from jax.experimental import pallas as pl
from jax.experimental.pallas import tpu as pltpu

LANE = 128
SUBLANE = 8


def _round_up(x, m):
    return ((x + m - 1) // m) * m


def actor_kernel(x_ref, w1_ref, w23_ref, b_ref, out_ref, *,
                 actions, log_std_min, log_std_max, compute_dtype):
    """One batch tile: 3 MXU matmuls (layer1, layer2, fused mean||log_std heads).

    x_ref:   (TB, D_in)   obs tile at native feature width (input dtype)
    w1_ref:  (D_in, S)    W1, zero-padded to S out-lanes          (compute_dtype)
    w23_ref: (2, S, S)    [W2 | (Wm||Ws)] zero-padded             (compute_dtype)
    b_ref:   (3, 1, S)    [b1 | b2 | (bm||bs)] zero-padded        (float32)
    out_ref: (TB, 2A)     cols [0:A) = mean, [A:2A) = clamped log_std (float32)
    """
    x = x_ref[...].astype(compute_dtype)

    # hidden layer 1: relu(x @ W1 + b1)   (f32 accumulate, f32 bias/ReLU)
    h = jnp.dot(x, w1_ref[...], preferred_element_type=jnp.float32)
    h = jnp.maximum(h + b_ref[0], 0.0)

    # hidden layer 2: relu(h @ W2 + b2)
    h = jnp.dot(h.astype(compute_dtype), w23_ref[0],
                preferred_element_type=jnp.float32)
    h = jnp.maximum(h + b_ref[1], 0.0)

    # fused heads: [mean || log_std] = h @ [Wm || Ws] + [bm || bs]
    heads = jnp.dot(h.astype(compute_dtype), w23_ref[1],
                    preferred_element_type=jnp.float32)
    heads = heads + b_ref[2]

    # clamp only the log_std lanes [A, 2A); mean lanes pass through untouched.
    col = jax.lax.broadcasted_iota(jnp.int32, heads.shape, 1)
    is_log_std = (col >= actions) & (col < 2 * actions)
    heads = jnp.where(is_log_std,
                      jnp.clip(heads, log_std_min, log_std_max), heads)

    # store only the 2A meaningful lanes.
    out_ref[...] = heads[:, :2 * actions].astype(out_ref.dtype)


def pack_actor_params(params, param_dtype=jnp.bfloat16):
    """Pack (w1,b1,w2,b2,wm,bm,ws,bs) into W1 + one weight slab + one bias slab.

    Weights are stored [in, out] (transposed vs. PyTorch). Hidden/head dims are
    zero-padded to S = round_up(max(H1, H2, 2A), 128) so matmuls 2/3 are
    lane-dense and padding contributes exact zeros. W1 keeps its native D_in
    contraction width.
    """
    w1, b1, w2, b2, wm, bm, ws, bs = params
    D_in, H1 = w1.shape
    H2 = w2.shape[1]
    A = wm.shape[1]
    S = _round_up(max(H1, H2, 2 * A), LANE)

    w1_pad = jnp.zeros((D_in, S), param_dtype)
    w1_pad = w1_pad.at[:, :H1].set(w1.astype(param_dtype))

    w23 = jnp.zeros((2, S, S), param_dtype)
    w23 = w23.at[0, :H1, :H2].set(w2.astype(param_dtype))
    w23 = w23.at[1, :H2, :A].set(wm.astype(param_dtype))
    w23 = w23.at[1, :H2, A:2 * A].set(ws.astype(param_dtype))

    b_slab = jnp.zeros((3, 1, S), jnp.float32)
    b_slab = b_slab.at[0, 0, :H1].set(b1.reshape(-1).astype(jnp.float32))
    b_slab = b_slab.at[1, 0, :H2].set(b2.reshape(-1).astype(jnp.float32))
    b_slab = b_slab.at[2, 0, :A].set(bm.reshape(-1).astype(jnp.float32))
    b_slab = b_slab.at[2, 0, A:2 * A].set(bs.reshape(-1).astype(jnp.float32))

    return w1_pad, w23, b_slab, (D_in, H1, H2, A, S)


def actor_forward(obs, packed, log_std_min=-20.0, log_std_max=2.0, *, block_b=1024):
    """obs: [B, input_dims] float32. Returns (mean, log_std): [B, actions] float32."""
    w1_pad, w23, b_slab, (D_in, H1, H2, A, S) = packed
    compute_dtype = w23.dtype

    obs = jnp.atleast_2d(jnp.asarray(obs))
    assert obs.shape[1] == D_in
    B = obs.shape[0]

    # Pad the batch only up to a sublane multiple (<= 7 rows); never to a tile.
    Bp = _round_up(B, SUBLANE)
    if Bp != B:
        obs = jnp.pad(obs, ((0, Bp - B), (0, 0)))

    # Tile the batch: large tiles for HBM roofline, >=2 grid steps when possible
    # (so both v7x TensorCores get work via the "parallel" axis), and a tile size
    # chosen to minimize tail padding. Ragged last tiles use Pallas masking.
    num_steps = max(pl.cdiv(Bp, block_b), min(2, Bp // SUBLANE))
    TB = _round_up(pl.cdiv(Bp, num_steps), SUBLANE)
    grid = (pl.cdiv(Bp, TB),)

    kernel = functools.partial(
        actor_kernel, actions=A,
        log_std_min=float(log_std_min), log_std_max=float(log_std_max),
        compute_dtype=compute_dtype)

    flops = 2 * B * (D_in * H1 + H1 * H2 + H2 * 2 * A)
    bytes_accessed = int(obs.size * obs.dtype.itemsize
                         + w1_pad.size * w1_pad.dtype.itemsize
                         + w23.size * w23.dtype.itemsize
                         + b_slab.size * 4
                         + Bp * 2 * A * 4)

    out = pl.pallas_call(
        kernel,
        out_shape=jax.ShapeDtypeStruct((Bp, 2 * A), jnp.float32),
        grid_spec=pltpu.PrefetchScalarGridSpec(
            num_scalar_prefetch=0,
            grid=grid,
            in_specs=[
                # obs tile streams with the batch grid (double-buffered), at its
                # native feature width (full-extent last dim).
                pl.BlockSpec((TB, D_in), lambda i: (i, 0)),
                # weight/bias slabs: constant block index -> stay VMEM-resident.
                pl.BlockSpec((D_in, S), lambda i: (0, 0)),
                pl.BlockSpec((2, S, S), lambda i: (0, 0, 0)),
                pl.BlockSpec((3, 1, S), lambda i: (0, 0, 0)),
            ],
            out_specs=pl.BlockSpec((TB, 2 * A), lambda i: (i, 0)),
        ),
        compiler_params=pltpu.CompilerParams(
            dimension_semantics=("parallel",),
        ),
        cost_estimate=pl.CostEstimate(
            flops=flops, transcendentals=0, bytes_accessed=bytes_accessed),
    )(obs, w1_pad, w23, b_slab)

    mean = out[:B, :A]
    log_std = out[:B, A:2 * A]
    return mean, log_std


def init_params(key, input_dims, h1_dims, h2_dims, actions, init_w=0.003):
    """Mirrors PyTorch defaults: nn.Linear U(-1/sqrt(fan_in), 1/sqrt(fan_in)) for
    hidden layers, U(-init_w, init_w) for the two heads. Weights stored [in, out]."""
    ks = jax.random.split(key, 8)

    def lin(kw, kb, fan_in, fan_out, bound):
        w = jax.random.uniform(kw, (fan_in, fan_out), jnp.float32, -bound, bound)
        b = jax.random.uniform(kb, (fan_out,), jnp.float32, -bound, bound)
        return w, b

    w1, b1 = lin(ks[0], ks[1], input_dims, h1_dims, 1.0 / float(input_dims) ** 0.5)
    w2, b2 = lin(ks[2], ks[3], h1_dims, h2_dims, 1.0 / float(h1_dims) ** 0.5)
    wm, bm = lin(ks[4], ks[5], h2_dims, actions, init_w)
    ws, bs = lin(ks[6], ks[7], h2_dims, actions, init_w)
    return (w1, b1, w2, b2, wm, bm, ws, bs)


def actor_reference(obs, params, log_std_min, log_std_max):
    w1, b1, w2, b2, wm, bm, ws, bs = params
    x = jnp.maximum(obs @ w1 + b1, 0.0)
    x = jnp.maximum(x @ w2 + b2, 0.0)
    mean = x @ wm + bm
    log_std = jnp.clip(x @ ws + bs, log_std_min, log_std_max)
    return mean, log_std


if __name__ == "__main__":
    input_dims, h1_dims, h2_dims, actions = 16, 32, 32, 4
    log_std_min, log_std_max = -20.0, 2.0

    key = jax.random.PRNGKey(0)
    k_obs, k_obs2, k_params = jax.random.split(key, 3)
    params = init_params(k_params, input_dims, h1_dims, h2_dims, actions)

    # --- small batch, f32 params (exact vs pure-JAX reference) ---
    obs = jax.random.normal(k_obs, (8, input_dims), dtype=jnp.float32)
    packed_f32 = pack_actor_params(params, jnp.float32)
    mean, log_std = actor_forward(obs, packed_f32, log_std_min, log_std_max)
    jax.block_until_ready((mean, log_std))
    ref_mean, ref_log_std = actor_reference(obs, params, log_std_min, log_std_max)
    assert mean.shape == (8, actions) and log_std.shape == (8, actions)
    assert jnp.allclose(mean, ref_mean, atol=1e-5)
    assert jnp.allclose(log_std, ref_log_std, atol=1e-5)

    # --- larger, non-multiple-of-8 batch exercising the pipelined batch grid,
    #     batch padding and a ragged (masked) last tile ---
    obs2 = jax.random.normal(k_obs2, (300, input_dims), dtype=jnp.float32)
    mean2, log_std2 = actor_forward(obs2, packed_f32, log_std_min, log_std_max,
                                    block_b=64)
    jax.block_until_ready((mean2, log_std2))
    ref_mean2, ref_log_std2 = actor_reference(obs2, params, log_std_min, log_std_max)
    assert mean2.shape == (300, actions) and log_std2.shape == (300, actions)
    assert jnp.allclose(mean2, ref_mean2, atol=1e-5)
    assert jnp.allclose(log_std2, ref_log_std2, atol=1e-5)

    # --- default bf16 MXU operands (v5e/v6e/v7x native), f32 accumulate ---
    packed_bf16 = pack_actor_params(params)   # param_dtype defaults to bf16
    mean_bf, log_std_bf = actor_forward(obs, packed_bf16, log_std_min, log_std_max)
    jax.block_until_ready((mean_bf, log_std_bf))
    assert jnp.allclose(mean_bf, ref_mean, atol=3e-2)
    assert jnp.allclose(log_std_bf, ref_log_std, atol=3e-2)

    print("KERNEL_OK")
</pallas_src>

<mosaic_0001>
module attributes {stable_mosaic.version = 11 : i64} {
  func.func @actor_kernel(%arg0: i32, %arg1: memref<8x16xf32, #tpu.memory_space<vmem>>, %arg2: memref<16x128xf32, #tpu.memory_space<vmem>>, %arg3: memref<2x128x128xf32, #tpu.memory_space<vmem>>, %arg4: memref<3x1x128xf32, #tpu.memory_space<vmem>>, %arg5: memref<8x8xf32, #tpu.memory_space<vmem>>) attributes {dimension_semantics = [#tpu.dimension_semantics<parallel>], iteration_bounds = array<i64: 1>, scalar_prefetch = 0 : i64, scratch_operands = 0 : i64, tpu.core_type = #tpu.core_type<tc>, window_params = [{transform_indices = @transform_0, window_bounds = array<i64: 8, 16>}, {pipeline_mode = #tpu.pipeline_mode<synchronous>, transform_indices = @transform_1, window_bounds = array<i64: 16, 128>}, {pipeline_mode = #tpu.pipeline_mode<synchronous>, transform_indices = @transform_2, window_bounds = array<i64: 2, 128, 128>}, {pipeline_mode = #tpu.pipeline_mode<synchronous>, transform_indices = @transform_3, window_bounds = array<i64: 3, 1, 128>}, {transform_indices = @transform_4, window_bounds = array<i64: 8, 8>}]} {
    %c0 = arith.constant 0 : index
    %c0_0 = arith.constant 0 : index
    %0 = vector.load %arg1[%c0, %c0_0] : memref<8x16xf32, #tpu.memory_space<vmem>>, vector<8x16xf32>
    %c0_1 = arith.constant 0 : index
    %c0_2 = arith.constant 0 : index
    %1 = vector.load %arg2[%c0_1, %c0_2] : memref<16x128xf32, #tpu.memory_space<vmem>>, vector<16x128xf32>
    %cst = arith.constant dense<0.000000e+00> : vector<8x128xf32>
    %2 = tpu.matmul %0, %1, %cst {dimension_numbers = #tpu.dot_dimension_numbers<[1], [0], [0], [1], [0, 0, 1, 1], [], []>} : vector<8x16xf32>, vector<16x128xf32>, vector<8x128xf32> -> vector<8x128xf32>
    %c0_3 = arith.constant 0 : index
    %c0_4 = arith.constant 0 : index
    %c0_5 = arith.constant 0 : index
    %3 = vector.load %arg4[%c0_3, %c0_4, %c0_5] : memref<3x1x128xf32, #tpu.memory_space<vmem>>, vector<1x1x128xf32>
    %4 = vector.shape_cast %3 : vector<1x1x128xf32> to vector<1x128xf32>
    %5 = vector.broadcast %4 : vector<1x128xf32> to vector<8x128xf32>
    %6 = arith.addf %2, %5 : vector<8x128xf32>
    %cst_6 = arith.constant 0.000000e+00 : f32
    %7 = vector.broadcast %cst_6 : f32 to vector<8x128xf32>
    %8 = arith.maximumf %6, %7 : vector<8x128xf32>
    %c0_7 = arith.constant 0 : index
    %c0_8 = arith.constant 0 : index
    %c0_9 = arith.constant 0 : index
    %9 = vector.load %arg3[%c0_7, %c0_8, %c0_9] : memref<2x128x128xf32, #tpu.memory_space<vmem>>, vector<1x128x128xf32>
    %10 = vector.shape_cast %9 : vector<1x128x128xf32> to vector<128x128xf32>
    %cst_10 = arith.constant dense<0.000000e+00> : vector<8x128xf32>
    %11 = tpu.matmul %8, %10, %cst_10 {dimension_numbers = #tpu.dot_dimension_numbers<[1], [0], [0], [1], [0, 0, 1, 1], [], []>} : vector<8x128xf32>, vector<128x128xf32>, vector<8x128xf32> -> vector<8x128xf32>
    %c1 = arith.constant 1 : index
    %c0_11 = arith.constant 0 : index
    %c0_12 = arith.constant 0 : index
    %12 = vector.load %arg4[%c1, %c0_11, %c0_12] : memref<3x1x128xf32, #tpu.memory_space<vmem>>, vector<1x1x128xf32>
    %13 = vector.shape_cast %12 : vector<1x1x128xf32> to vector<1x128xf32>
    %14 = vector.broadcast %13 : vector<1x128xf32> to vector<8x128xf32>
    %15 = arith.addf %11, %14 : vector<8x128xf32>
    %cst_13 = arith.constant 0.000000e+00 : f32
    %16 = vector.broadcast %cst_13 : f32 to vector<8x128xf32>
    %17 = arith.maximumf %15, %16 : vector<8x128xf32>
    %c1_14 = arith.constant 1 : index
    %c0_15 = arith.constant 0 : index
    %c0_16 = arith.constant 0 : index
    %18 = vector.load %arg3[%c1_14, %c0_15, %c0_16] : memref<2x128x128xf32, #tpu.memory_space<vmem>>, vector<1x128x128xf32>
    %19 = vector.shape_cast %18 : vector<1x128x128xf32> to vector<128x128xf32>
    %cst_17 = arith.constant dense<0.000000e+00> : vector<8x128xf32>
    %20 = tpu.matmul %17, %19, %cst_17 {dimension_numbers = #tpu.dot_dimension_numbers<[1], [0], [0], [1], [0, 0, 1, 1], [], []>} : vector<8x128xf32>, vector<128x128xf32>, vector<8x128xf32> -> vector<8x128xf32>
    %c2 = arith.constant 2 : index
    %c0_18 = arith.constant 0 : index
    %c0_19 = arith.constant 0 : index
    %21 = vector.load %arg4[%c2, %c0_18, %c0_19] : memref<3x1x128xf32, #tpu.memory_space<vmem>>, vector<1x1x128xf32>
    %22 = vector.shape_cast %21 : vector<1x1x128xf32> to vector<1x128xf32>
    %23 = vector.broadcast %22 : vector<1x128xf32> to vector<8x128xf32>
    %24 = arith.addf %20, %23 : vector<8x128xf32>
    %25 = tpu.iota {dimensions = array<i32: 1>} : vector<8x128xi32>
    %c4_i32 = arith.constant 4 : i32
    %26 = vector.broadcast %c4_i32 : i32 to vector<8x128xi32>
    %27 = arith.cmpi sge, %25, %26 : vector<8x128xi32>
    %c8_i32 = arith.constant 8 : i32
    %28 = vector.broadcast %c8_i32 : i32 to vector<8x128xi32>
    %29 = arith.cmpi slt, %25, %28 : vector<8x128xi32>
    %30 = arith.andi %27, %29 : vector<8x128xi1>
    %cst_20 = arith.constant -2.000000e+01 : f32
    %cst_21 = arith.constant 2.000000e+00 : f32
    %31 = vector.broadcast %cst_20 : f32 to vector<8x128xf32>
    %32 = arith.maximumf %31, %24 : vector<8x128xf32>
    %33 = vector.broadcast %cst_21 : f32 to vector<8x128xf32>
    %34 = arith.minimumf %33, %32 : vector<8x128xf32>
    %35 = arith.select %30, %34, %24 : vector<8x128xi1>, vector<8x128xf32>
    %36 = vector.extract_strided_slice %35 {offsets = [0, 0], sizes = [8, 8], strides = [1, 1]} : vector<8x128xf32> to vector<8x8xf32>
    %c0_22 = arith.constant 0 : index
    %c0_23 = arith.constant 0 : index
    %37 = vector.load %arg5[%c0_22, %c0_23] : memref<8x8xf32, #tpu.memory_space<vmem>>, vector<8x8xf32>
    tpu.vector_store %arg5[%c0_22, %c0_23], %36 {strides = array<i32>} : memref<8x8xf32, #tpu.memory_space<vmem>>, vector<8x8xf32>,
    return
  }
  func.func @transform_0(%arg0: i32) -> (i32, i32) {
    %c0_i32 = arith.constant 0 : i32
    %c0_i32_0 = arith.constant 0 : i32
    return %arg0, %c0_i32 : i32, i32
  }
  func.func @transform_1(%arg0: i32) -> (i32, i32) {
    %c0_i32 = arith.constant 0 : i32
    %c0_i32_0 = arith.constant 0 : i32
    %c0_i32_1 = arith.constant 0 : i32
    return %c0_i32, %c0_i32_0 : i32, i32
  }
  func.func @transform_2(%arg0: i32) -> (i32, i32, i32) {
    %c0_i32 = arith.constant 0 : i32
    %c0_i32_0 = arith.constant 0 : i32
    %c0_i32_1 = arith.constant 0 : i32
    %c0_i32_2 = arith.constant 0 : i32
    return %c0_i32, %c0_i32_0, %c0_i32_1 : i32, i32, i32
  }
  func.func @transform_3(%arg0: i32) -> (i32, i32, i32) {
    %c0_i32 = arith.constant 0 : i32
    %c0_i32_0 = arith.constant 0 : i32
    %c0_i32_1 = arith.constant 0 : i32
    %c0_i32_2 = arith.constant 0 : i32
    return %c0_i32, %c0_i32_0, %c0_i32_1 : i32, i32, i32
  }
  func.func @transform_4(%arg0: i32) -> (i32, i32) {
    %c0_i32 = arith.constant 0 : i32
    %c0_i32_0 = arith.constant 0 : i32
    return %arg0, %c0_i32 : i32, i32
  }
}

</mosaic_0001>

<llo_original>
// kernel: tpu_custom_call.1
$region0: #{tpu_custom_call.1}
  #allocation0 [shape = 'u32[]', space=smem, size = 0x4, offset = 0x4, fixed_abs, tag = 'smem constant byte address 0x4 - core index']
  #allocation1 [shape = 'u32[144,128]{1,0:T(1,128)}', space=vmem, size = 0x12000, scoped, tag = 'internal scratch']
  %s0 = inlined_call_operand.hbm [shape: f32[8,16], index: 0, kind: input, shape index: {}]
  %s1 = inlined_call_operand.hbm [shape: f32[16,128], index: 1, kind: input, shape index: {}]
  %s2 = inlined_call_operand.hbm [shape: f32[2,128,128], index: 2, kind: input, shape index: {}]
  %s3 = inlined_call_operand.vmem [shape: f32[3,1,128], index: 3, kind: input, shape index: {}]
  %s4 = inlined_call_operand.hbm [shape: f32[8,8], index: 4, kind: output, shape index: {}]
  %s5 = sld [smem:[#allocation0]]
  $region38: #{tpu_custom_call.1} parent=0
    _
  %s7 = ssub.s32 1, %s5
  %s8 = scalar_select 0, %s7, %s5
  $region1: #{tpu_custom_call.1} parent=0
    #allocation2 [shape = 'u8[4096]{0}', space=vmem, size = 0x1000, scoped, tag = 'input window, operand 0, single buffered']
    #allocation3 [shape = 's32[1]{0}', space=sflag, size = 0x4, scoped, tag = 'scoped memory for tpu_custom_call.1']
    #allocation4 [shape = 's32[1]{0}', space=sflag, size = 0x4, scoped, tag = 'scoped memory for tpu_custom_call.1']
    #allocation5 [shape = 'u8[8192]{0}', space=vmem, size = 0x2000, scoped, tag = 'input window, operand 1, single buffered']
    #allocation6 [shape = 's32[1]{0}', space=sflag, size = 0x4, scoped, tag = 'scoped memory for tpu_custom_call.1']
    #allocation7 [shape = 'u8[131072]{0}', space=vmem, size = 0x20000, scoped, tag = 'input window, operand 2, single buffered']
    #allocation8 [shape = 'u8[4096]{0}', space=vmem, size = 0x1000, scoped, tag = 'output window, operand 0, single buffered']
    %9 = vsyncpa [#allocation3], 0
    %10 = vsyncpa [#allocation6], 0
    %11 = vsyncpa [#allocation4], 0
    // Predicated region
    $region2: #{tpu_custom_call.1} parent=1 // pred_check
      _
    $region3: #{tpu_custom_call.1} parent=1 // pred_check_branch
      %13 = sbr.rel (0) target = $region5
    $region4: #{tpu_custom_call.1} parent=1 // pred_region
      %s15 = ssub.s32 128, 128
      %16 = vsyncadd [#allocation3], %s15
      %s18 = sshll.u32 [#allocation2], 4
      %s19 = int_to_ptr.vmem [resolvable:$true] %s18
      %21 = dma.hbm_to_vmem [thread:$0]  %s0, 128, %s19, [#allocation3]
    $region5: #{tpu_custom_call.1} parent=1 // pred_fallthru
      _
    // Predicated region
    $region6: #{tpu_custom_call.1} parent=1 // pred_check
      _
    $region7: #{tpu_custom_call.1} parent=1 // pred_check_branch
      %23 = sbr.rel (0) target = $region9
    $region8: #{tpu_custom_call.1} parent=1 // pred_region
      %s25 = ssub.s32 256, 256
      %26 = vsyncadd [#allocation6], %s25
      %s27 = sshll.u32 [#allocation5], 4
      %s28 = int_to_ptr.vmem [resolvable:$true] %s27
      %33 = dma.hbm_to_vmem [thread:$0]  %s1, 256, %s28, [#allocation6], 128, 128, 8
    $region9: #{tpu_custom_call.1} parent=1 // pred_fallthru
      _
    // Predicated region
    $region10: #{tpu_custom_call.1} parent=1 // pred_check
      _
    $region11: #{tpu_custom_call.1} parent=1 // pred_check_branch
      %35 = sbr.rel (0) target = $region13
    $region12: #{tpu_custom_call.1} parent=1 // pred_region
      %s37 = ssub.s32 4096, 4096
      %38 = vsyncadd [#allocation6], %s37
      %s39 = sshll.u32 [#allocation7], 4
      %s40 = int_to_ptr.vmem [resolvable:$true] %s39
      %45 = dma.hbm_to_vmem [thread:$0]  %s2, 4096, %s40, [#allocation6], 128, 128, 8
    $region13: #{tpu_custom_call.1} parent=1 // pred_fallthru
      _
    // Predicated region
    $region14: #{tpu_custom_call.1} parent=1 // pred_check
      _
    $region15: #{tpu_custom_call.1} parent=1 // pred_check_branch
      %47 = sbr.rel (0) target = $region17
    $region16: #{tpu_custom_call.1} parent=1 // pred_region
      _
    $region17: #{tpu_custom_call.1} parent=1 // pred_fallthru
      _
    // Predicated region
    $region18: #{tpu_custom_call.1} parent=1 // pred_check
      _
    $region19: #{tpu_custom_call.1} parent=1 // pred_check_branch
      %49 = sbr.rel (0) target = $region21
    $region20: #{tpu_custom_call.1} parent=1 // pred_region
      %50 = dma.done [#allocation3], 128
    $region21: #{tpu_custom_call.1} parent=1 // pred_fallthru
      _
    // Predicated region
    $region22: #{tpu_custom_call.1} parent=1 // pred_check
      _
    $region23: #{tpu_custom_call.1} parent=1 // pred_check_branch
      %52 = sbr.rel (0) target = $region25
    $region24: #{tpu_custom_call.1} parent=1 // pred_region
      %53 = dma.done [#allocation6], 256
    $region25: #{tpu_custom_call.1} parent=1 // pred_fallthru
      _
    // Predicated region
    $region26: #{tpu_custom_call.1} parent=1 // pred_check
      _
    $region27: #{tpu_custom_call.1} parent=1 // pred_check_branch
      %55 = sbr.rel (0) target = $region29
    $region28: #{tpu_custom_call.1} parent=1 // pred_region
      %56 = dma.done [#allocation6], 4096
    $region29: #{tpu_custom_call.1} parent=1 // pred_fallthru
      _
    %v57 = vld [vmem:[#allocation2] sm:$0xff]
    %v58 = vld [vmem:[#allocation5] sm:$0xff]
    %v59 = vld [vmem:[#allocation5 + $0x8] sm:$0xff]
    %v60 = vld [vmem:[%s3] sm:$0x1]
    %v62 = vlaneseq
    %v63 = vshrl.u32 %v62, 7
    %v64 = vsub.s32 0, %v63
    %v65 = vrot.slane %v60, %v64
    %vm67 = vcmask 130048
    %v69 = vsel %vm67, %v57, 0
    %71 = vmatprep.subr.mxu0 0.0
    %72 = vmatpush1.msra.mxu0 %v58
    %73 = vmatprep.subr.mxu0 0.0
    %74 = vmatpush1.msra.mxu0 %v59
    %75 = vmatprep.subr.mxu0 0.0
    %76 = vmatpush1.msra.mxu0 0.0
    %77 = vmatprep.subr.mxu0 0.0
    %78 = vmatpush1.msra.mxu0 0.0
    %79 = vmatprep.subr.mxu0 0.0
    %80 = vmatpush1.msra.mxu0 0.0
    %81 = vmatprep.subr.mxu0 0.0
    %82 = vmatpush1.msra.mxu0 0.0
    %83 = vmatprep.subr.mxu0 0.0
    %84 = vmatpush1.msra.mxu0 0.0
    %85 = vmatprep.subr.mxu0 0.0
    %86 = vmatpush1.msra.mxu0 0.0
    %87 = vmatprep.subr.mxu0 0.0
    %88 = vmatpush1.msra.mxu0 0.0
    %89 = vmatprep.subr.mxu0 0.0
    %90 = vmatpush1.msra.mxu0 0.0
    %91 = vmatprep.subr.mxu0 0.0
    %92 = vmatpush1.msra.mxu0 0.0
    %93 = vmatprep.subr.mxu0 0.0
    %94 = vmatpush1.msra.mxu0 0.0
    %95 = vmatprep.subr.mxu0 0.0
    %96 = vmatpush1.msra.mxu0 0.0
    %97 = vmatprep.subr.mxu0 0.0
    %98 = vmatpush1.msra.mxu0 0.0
    %99 = vmatprep.subr.mxu0 0.0
    %100 = vmatpush1.msra.mxu0 0.0
    %101 = vmatprep.subr.mxu0 0.0
    %102 = vmatpush1.msra.mxu0 0.0
    %103 = vmatprep.subr.mxu0 0.0
    %104 = vmatpush1.msra.mxu0 0.0
    %105 = vmatprep.subr.mxu0 0.0
    %106 = vmatpush1.msra.mxu0 0.0
    %107 = vmatprep.subr.mxu0 0.0
    %108 = vmatpush1.msra.mxu0 0.0
    %109 = vmatprep.subr.mxu0 0.0
    %110 = vmatpush1.msra.mxu0 0.0
    %111 = vmatprep.subr.mxu0 0.0
    %112 = vmatpush1.msra.mxu0 0.0
    %113 = vmatprep.subr.mxu0 0.0
    %114 = vmatpush1.msra.mxu0 0.0
    %115 = vmatprep.subr.mxu0 0.0
    %116 = vmatpush1.msra.mxu0 0.0
    %117 = vmatprep.subr.mxu0 0.0
    %118 = vmatpush1.msra.mxu0 0.0
    %119 = vmatprep.subr.mxu0 0.0
    %120 = vmatpush1.msra.mxu0 0.0
    %121 = vmatprep.subr.mxu0 0.0
    %122 = vmatpush1.msra.mxu0 0.0
    %123 = vmatprep.subr.mxu0 0.0
    %124 = vmatpush1.msra.mxu0 0.0
    %125 = vmatprep.subr.mxu0 0.0
    %126 = vmatpush1.msra.mxu0 0.0
    %127 = vmatprep.subr.mxu0 0.0
    %128 = vmatpush1.msra.mxu0 0.0
    %129 = vmatprep.subr.mxu0 0.0
    %130 = vmatpush1.msra.mxu0 0.0
    %131 = vmatprep.subr.mxu0 0.0
    %132 = vmatpush1.msra.mxu0 0.0
    %133 = vmatprep.subr.mxu0 0.0
    %134 = vmatpush1.msra.mxu0 0.0
    %135 = vmatprep.mubr.f32.mxu0 0.0
    %136 = vmatmul.mubr.f32.gmra.mrb[0].mxu0 %v69
    %v137 = vpop.f32.mrb[0].mxu0
    %v138 = vadd.f32 %v65, %v137
    %v139 = vpop.f32.mrb[0].mxu0
    %140 = vdwg.mxu0
    %v141 = vmax.f32 %v138, 0.0
    %v142 = vld [vmem:[#allocation7] sm:$0xff]
    %v143 = vld [vmem:[#allocation7 + $0x8] sm:$0xff]
    %v144 = vld [vmem:[#allocation7 + $0x10] sm:$0xff]
    %v145 = vld [vmem:[#allocation7 + $0x18] sm:$0xff]
    %v146 = vld [vmem:[#allocation7 + $0x20] sm:$0xff]
    %v147 = vld [vmem:[#allocation7 + $0x28] sm:$0xff]
    %v148 = vld [vmem:[#allocation7 + $0x30] sm:$0xff]
    %v149 = vld [vmem:[#allocation7 + $0x38] sm:$0xff]
    %v150 = vld [vmem:[#allocation7 + $0x40] sm:$0xff]
    %v151 = vld [vmem:[#allocation7 + $0x48] sm:$0xff]
    %v152 = vld [vmem:[#allocation7 + $0x50] sm:$0xff]
    %v153 = vld [vmem:[#allocation7 + $0x58] sm:$0xff]
    %v154 = vld [vmem:[#allocation7 + $0x60] sm:$0xff]
    %v155 = vld [vmem:[#allocation7 + $0x68] sm:$0xff]
    %v156 = vld [vmem:[#allocation7 + $0x70] sm:$0xff]
    %v157 = vld [vmem:[#allocation7 + $0x78] sm:$0xff]
    %s158 = scalar_lea.vmem %s3, 1
    %v159 = vld [vmem:[%s158] sm:$0x1]
    %v161 = vlaneseq
    %v162 = vshrl.u32 %v161, 7
    %v163 = vsub.s32 0, %v162
    %v164 = vrot.slane %v159, %v163
    %166 = vmatprep.subr.mxu0 0.0
    %167 = vmatpush1.msra.mxu0 %v142
    %168 = vmatprep.subr.mxu0 0.0
    %169 = vmatpush1.msra.mxu0 %v143
    %170 = vmatprep.subr.mxu0 0.0
    %171 = vmatpush1.msra.mxu0 %v144
    %172 = vmatprep.subr.mxu0 0.0
    %173 = vmatpush1.msra.mxu0 %v145
    %174 = vmatprep.subr.mxu0 0.0
    %175 = vmatpush1.msra.mxu0 %v146
    %176 = vmatprep.subr.mxu0 0.0
    %177 = vmatpush1.msra.mxu0 %v147
    %178 = vmatprep.subr.mxu0 0.0
    %179 = vmatpush1.msra.mxu0 %v148
    %180 = vmatprep.subr.mxu0 0.0
    %181 = vmatpush1.msra.mxu0 %v149
    %182 = vmatprep.subr.mxu0 0.0
    %183 = vmatpush1.msra.mxu0 %v150
    %184 = vmatprep.subr.mxu0 0.0
    %185 = vmatpush1.msra.mxu0 %v151
    %186 = vmatprep.subr.mxu0 0.0
    %187 = vmatpush1.msra.mxu0 %v152
    %188 = vmatprep.subr.mxu0 0.0
    %189 = vmatpush1.msra.mxu0 %v153
    %190 = vmatprep.subr.mxu0 0.0
    %191 = vmatpush1.msra.mxu0 %v154
    %192 = vmatprep.subr.mxu0 0.0
    %193 = vmatpush1.msra.mxu0 %v155
    %194 = vmatprep.subr.mxu0 0.0
    %195 = vmatpush1.msra.mxu0 %v156
    %196 = vmatprep.subr.mxu0 0.0
    %197 = vmatpush1.msra.mxu0 %v157
    %198 = vmatprep.subr.mxu0 0.0
    %199 = vmatpush1.msra.mxu0 0.0
    %200 = vmatprep.subr.mxu0 0.0
    %201 = vmatpush1.msra.mxu0 0.0
    %202 = vmatprep.subr.mxu0 0.0
    %203 = vmatpush1.msra.mxu0 0.0
    %204 = vmatprep.subr.mxu0 0.0
    %205 = vmatpush1.msra.mxu0 0.0
    %206 = vmatprep.subr.mxu0 0.0
    %207 = vmatpush1.msra.mxu0 0.0
    %208 = vmatprep.subr.mxu0 0.0
    %209 = vmatpush1.msra.mxu0 0.0
    %210 = vmatprep.subr.mxu0 0.0
    %211 = vmatpush1.msra.mxu0 0.0
    %212 = vmatprep.subr.mxu0 0.0
    %213 = vmatpush1.msra.mxu0 0.0
    %214 = vmatprep.subr.mxu0 0.0
    %215 = vmatpush1.msra.mxu0 0.0
    %216 = vmatprep.subr.mxu0 0.0
    %217 = vmatpush1.msra.mxu0 0.0
    %218 = vmatprep.subr.mxu0 0.0
    %219 = vmatpush1.msra.mxu0 0.0
    %220 = vmatprep.subr.mxu0 0.0
    %221 = vmatpush1.msra.mxu0 0.0
    %222 = vmatprep.subr.mxu0 0.0
    %223 = vmatpush1.msra.mxu0 0.0
    %224 = vmatprep.subr.mxu0 0.0
    %225 = vmatpush1.msra.mxu0 0.0
    %226 = vmatprep.subr.mxu0 0.0
    %227 = vmatpush1.msra.mxu0 0.0
    %228 = vmatprep.subr.mxu0 0.0
    %229 = vmatpush1.msra.mxu0 0.0
    %230 = vmatprep.mubr.f32.mxu0 0.0
    %231 = vmatmul.mubr.f32.gmra.mrb[0].mxu0 %v141
    %v232 = vpop.f32.mrb[0].mxu0
    %v233 = vadd.f32 %v164, %v232
    %v234 = vpop.f32.mrb[0].mxu0
    %235 = vdwg.mxu0
    %v236 = vmax.f32 %v233, 0.0
    %s237 = scalar_lea.vmem [#allocation7], 128
    %v238 = vld [vmem:[%s237] sm:$0xff]
    %v239 = vld [vmem:[%s237 + $0x8] sm:$0xff]
    %v240 = vld [vmem:[%s237 + $0x10] sm:$0xff]
    %v241 = vld [vmem:[%s237 + $0x18] sm:$0xff]
    %v242 = vld [vmem:[%s237 + $0x20] sm:$0xff]
    %v243 = vld [vmem:[%s237 + $0x28] sm:$0xff]
    %v244 = vld [vmem:[%s237 + $0x30] sm:$0xff]
    %v245 = vld [vmem:[%s237 + $0x38] sm:$0xff]
    %v246 = vld [vmem:[%s237 + $0x40] sm:$0xff]
    %v247 = vld [vmem:[%s237 + $0x48] sm:$0xff]
    %v248 = vld [vmem:[%s237 + $0x50] sm:$0xff]
    %v249 = vld [vmem:[%s237 + $0x58] sm:$0xff]
    %v250 = vld [vmem:[%s237 + $0x60] sm:$0xff]
    %v251 = vld [vmem:[%s237 + $0x68] sm:$0xff]
    %v252 = vld [vmem:[%s237 + $0x70] sm:$0xff]
    %v253 = vld [vmem:[%s237 + $0x78] sm:$0xff]
    %s254 = scalar_lea.vmem %s3, 2
    %v255 = vld [vmem:[%s254] sm:$0x1]
    %v257 = vlaneseq
    %v258 = vshrl.u32 %v257, 7
    %v259 = vsub.s32 0, %v258
    %v260 = vrot.slane %v255, %v259
    %262 = vmatprep.subr.mxu0 0.0
    %263 = vmatpush1.msra.mxu0 %v238
    %264 = vmatprep.subr.mxu0 0.0
    %265 = vmatpush1.msra.mxu0 %v239
    %266 = vmatprep.subr.mxu0 0.0
    %267 = vmatpush1.msra.mxu0 %v240
    %268 = vmatprep.subr.mxu0 0.0
    %269 = vmatpush1.msra.mxu0 %v241
    %270 = vmatprep.subr.mxu0 0.0
    %271 = vmatpush1.msra.mxu0 %v242
    %272 = vmatprep.subr.mxu0 0.0
    %273 = vmatpush1.msra.mxu0 %v243
    %274 = vmatprep.subr.mxu0 0.0
    %275 = vmatpush1.msra.mxu0 %v244
    %276 = vmatprep.subr.mxu0 0.0
    %277 = vmatpush1.msra.mxu0 %v245
    %278 = vmatprep.subr.mxu0 0.0
    %279 = vmatpush1.msra.mxu0 %v246
    %280 = vmatprep.subr.mxu0 0.0
    %281 = vmatpush1.msra.mxu0 %v247
    %282 = vmatprep.subr.mxu0 0.0
    %283 = vmatpush1.msra.mxu0 %v248
    %284 = vmatprep.subr.mxu0 0.0
    %285 = vmatpush1.msra.mxu0 %v249
    %286 = vmatprep.subr.mxu0 0.0
    %287 = vmatpush1.msra.mxu0 %v250
    %288 = vmatprep.subr.mxu0 0.0
    %289 = vmatpush1.msra.mxu0 %v251
    %290 = vmatprep.subr.mxu0 0.0
    %291 = vmatpush1.msra.mxu0 %v252
    %292 = vmatprep.subr.mxu0 0.0
    %293 = vmatpush1.msra.mxu0 %v253
    %294 = vmatprep.subr.mxu0 0.0
    %295 = vmatpush1.msra.mxu0 0.0
    %296 = vmatprep.subr.mxu0 0.0
    %297 = vmatpush1.msra.mxu0 0.0
    %298 = vmatprep.subr.mxu0 0.0
    %299 = vmatpush1.msra.mxu0 0.0
    %300 = vmatprep.subr.mxu0 0.0
    %301 = vmatpush1.msra.mxu0 0.0
    %302 = vmatprep.subr.mxu0 0.0
    %303 = vmatpush1.msra.mxu0 0.0
    %304 = vmatprep.subr.mxu0 0.0
    %305 = vmatpush1.msra.mxu0 0.0
    %306 = vmatprep.subr.mxu0 0.0
    %307 = vmatpush1.msra.mxu0 0.0
    %308 = vmatprep.subr.mxu0 0.0
    %309 = vmatpush1.msra.mxu0 0.0
    %310 = vmatprep.subr.mxu0 0.0
    %311 = vmatpush1.msra.mxu0 0.0
    %312 = vmatprep.subr.mxu0 0.0
    %313 = vmatpush1.msra.mxu0 0.0
    %314 = vmatprep.subr.mxu0 0.0
    %315 = vmatpush1.msra.mxu0 0.0
    %316 = vmatprep.subr.mxu0 0.0
    %317 = vmatpush1.msra.mxu0 0.0
    %318 = vmatprep.subr.mxu0 0.0
    %319 = vmatpush1.msra.mxu0 0.0
    %320 = vmatprep.subr.mxu0 0.0
    %321 = vmatpush1.msra.mxu0 0.0
    %322 = vmatprep.subr.mxu0 0.0
    %323 = vmatpush1.msra.mxu0 0.0
    %324 = vmatprep.subr.mxu0 0.0
    %325 = vmatpush1.msra.mxu0 0.0
    %326 = vmatprep.mubr.f32.mxu0 0.0
    %327 = vmatmul.mubr.f32.gmra.mrb[0].mxu0 %v236
    %v328 = vpop.f32.mrb[0].mxu0
    %v329 = vadd.f32 %v260, %v328
    %v330 = vpop.f32.mrb[0].mxu0
    %331 = vdwg.mxu0
    %v332 = vlaneseq
    %v333 = vand.u32 %v332, 127
    %vm334 = vcmp.ge.s32.totalorder %v333, 4
    %vm335 = vcmp.lt.s32.totalorder %v333, 8
    %vm336 = vmand %vm334, %vm335
    %v337 = vmax.f32 %v329, -20.0
    %v338 = vmin.f32 %v337, 2.0
    %v339 = vsel %vm336, %v338, %v329
    %vm340 = vcmask 64512
    %341 = vst.msk [vmem:[#allocation8] sm:$0xff] %vm340, %v339
    // Predicated region
    $region30: #{tpu_custom_call.1} parent=1 // pred_check
      _
    $region31: #{tpu_custom_call.1} parent=1 // pred_check_branch
      %343 = sbr.rel (0) target = $region33
    $region32: #{tpu_custom_call.1} parent=1 // pred_region
      %s345 = ssub.s32 128, 128
      %346 = vsyncadd [#allocation4], %s345
      %s348 = sshll.u32 [#allocation8], 4
      %s349 = int_to_ptr.vmem [resolvable:$true] %s348
      %351 = dma.vmem_to_hbm [thread:$0]  %s349, 128, %s4, [#allocation4]
    $region33: #{tpu_custom_call.1} parent=1 // pred_fallthru
      _
    // Predicated region
    $region34: #{tpu_custom_call.1} parent=1 // pred_check
      _
    $region35: #{tpu_custom_call.1} parent=1 // pred_check_branch
      %353 = sbr.rel (0) target = $region37
    $region36: #{tpu_custom_call.1} parent=1 // pred_region
      %354 = dma.done [#allocation4], 128
    $region37: #{tpu_custom_call.1} parent=1 // pred_fallthru
      _
    %355 = vsyncpa [#allocation3], 1
    %356 = vsyncpa [#allocation6], 1
    %357 = vsyncpa [#allocation4], 1

</llo_original>
